<compile_context>
chip_gen: v7x
topology: tpu7x:2x2x1
jax: 0.10.0
libtpu: 0.0.40
codegen_flags: <defaults>
</compile_context>

<pallas_src>
import functools

import jax
import jax.numpy as jnp
from jax import lax
from jax.experimental import pallas as pl
from jax.experimental.pallas import tpu as pltpu


# ----------------------------- backward kernel -----------------------------
def _grad_mod_bwd_kernel(g_ref, o_ref, *, scaling_ratio, epi_sq, inv_div_small):
    # All three scalars are Python floats baked in at trace time.
    gf = g_ref[...].astype(jnp.float32)
    # Per-row sum of squares, accumulated in f32 (also for bf16 inputs).
    sum_sq = jnp.sum(gf * gf, axis=1, keepdims=True)               # (TB, 1) f32
    # length <= epi  <=>  sum_sq <= epi^2 (both sides non-negative; may differ
    # by one ulp exactly at the threshold vs. the PyTorch reference).
    # rsqrt runs on the EUP slot; the rsqrt(0)=inf lane is selected away.
    inv = jnp.where(sum_sq <= epi_sq, inv_div_small, lax.rsqrt(sum_sq))
    if scaling_ratio != 1.0:        # fold the scale into the per-row column
        inv = inv * scaling_ratio
    # One broadcast multiply over the (TB, F) tile in f32, cast once on store.
    o_ref[...] = (gf * inv).astype(o_ref.dtype)


# ------------------------------ tiling helpers ------------------------------
@functools.lru_cache(maxsize=None)
def _vmem_limit_bytes() -> int:
    """~Half of physical VMEM: 64 MiB on v5e/v6e (128 MiB), 32 MiB on v7x (64 MiB)."""
    cap = 64 * 1024 * 1024          # conservative fallback (v7x per-TC VMEM)
    try:
        cap = int(pltpu.get_tpu_info().vmem_capacity_bytes)
    except Exception:
        pass
    return min(max(cap // 2, 16 * 1024 * 1024), 64 * 1024 * 1024)


def _choose_row_tile(batch: int, features_padded: int, itemsize: int,
                     budget_bytes: int) -> int:
    """Pick a batch-tile size.

    Accounts for in+out double-buffered tiles plus ~2 live f32 intermediates
    (the bf16->f32 upcast and the squared product), rounds to the dtype's
    sublane multiple, keeps blocks near >=1 MiB, and caps the tile so the grid
    has >=2 (ideally >=4) steps for v7x megacore splitting / DMA overlap.
    """
    sublane = max(8, 32 // max(1, itemsize))        # 8 f32, 16 bf16, 32 int8/fp8
    if batch <= sublane:
        return batch                                # full-dim block is legal

    live_per_row = features_padded * (4 * itemsize + 8)
    tb_budget = max(sublane,
                    (budget_bytes // max(1, live_per_row)) // sublane * sublane)

    # Guarantee multiple grid steps when the batch allows it.
    if batch >= 4 * sublane:
        cap = pl.cdiv(batch, 4)
    elif batch >= 2 * sublane:
        cap = pl.cdiv(batch, 2)
    else:
        cap = batch
    cap = max(sublane, (cap // sublane) * sublane)

    tb = min(tb_budget, cap)
    # Keep each block near/above ~1 MiB (HBM-roofline plateau) where cap allows.
    one_mib_rows = (1 << 20) // max(1, features_padded * itemsize)
    one_mib_rows = max(sublane, (one_mib_rows // sublane) * sublane)
    tb = max(tb, min(one_mib_rows, cap))
    return max(1, min(tb, tb_budget, batch))


# ------------------------------ pallas wrapper ------------------------------
def _backward_pallas(g: jax.Array, scaling_ratio: float, epi: float,
                     div_me_when_g_too_small: float, *,
                     row_tile: int | None = None) -> jax.Array:
    batch, features = g.shape
    itemsize = jnp.dtype(g.dtype).itemsize

    # Lane-dense feature dim: zero-pad to a multiple of 128 (padding zeros do
    # not change the row sum-of-squares), slice back after the kernel.
    f_pad = ((features + 127) // 128) * 128
    g_work = g if f_pad == features else jnp.pad(g, ((0, 0), (0, f_pad - features)))

    vmem_limit = _vmem_limit_bytes()
    budget_bytes = (vmem_limit * 3) // 4
    tb = row_tile if row_tile is not None else _choose_row_tile(
        batch, f_pad, itemsize, budget_bytes)

    kernel = functools.partial(
        _grad_mod_bwd_kernel,
        scaling_ratio=float(scaling_ratio),
        epi_sq=float(epi) * float(epi),
        inv_div_small=1.0 / float(div_me_when_g_too_small),
    )

    out = pl.pallas_call(
        kernel,
        out_shape=jax.ShapeDtypeStruct((batch, f_pad), g.dtype),
        grid=(pl.cdiv(batch, tb),),
        in_specs=[
            # Gradient: batch-tiled, full (padded) feature width (reduction axis=1).
            pl.BlockSpec((tb, f_pad), lambda i: (i, 0)),
        ],
        out_specs=pl.BlockSpec((tb, f_pad), lambda i: (i, 0)),
        # Reuse the (possibly padded) gradient buffer for the output.
        input_output_aliases={0: 0},
        compiler_params=pltpu.CompilerParams(
            dimension_semantics=("parallel",),   # row tiles are independent
            vmem_limit_bytes=vmem_limit,
        ),
        cost_estimate=pl.CostEstimate(
            flops=3 * batch * f_pad,             # square + reduce-add + scale
            transcendentals=batch,               # one rsqrt per row
            bytes_accessed=2 * batch * f_pad * itemsize,
        ),
    )(g_work)

    if f_pad != features:
        out = out[:, :features]
    return out


# ------------------------- custom_vjp glue (plain JAX) ----------------------
@functools.partial(jax.custom_vjp, nondiff_argnums=(1, 2, 3))
def _gradient_modification(x, scaling_ratio, epi, div_me_when_g_too_small):
    # Forward is a pure pass-through; no kernel / no HBM copy needed.
    return x


def _gm_fwd(x, scaling_ratio, epi, div_me_when_g_too_small):
    return x, None


def _gm_bwd(scaling_ratio, epi, div_me_when_g_too_small, residuals, g):
    del residuals
    return (_backward_pallas(g, scaling_ratio, epi, div_me_when_g_too_small),)


_gradient_modification.defvjp(_gm_fwd, _gm_bwd)


class GradientModification:
    """JAX/Pallas port of the PyTorch GradientModification module."""

    # TODO(synk): PyTorch's `x.requires_grad` check has no JAX equivalent
    # (differentiation is requested via jax.grad / jax.vjp at call sites).

    def __init__(self, scaling_ratio: float = 1.0, epi: float = 1e-05,
                 div_me_when_g_too_small: float = 0.001) -> None:
        self.scaling_ratio = float(scaling_ratio)
        self.epi = float(epi)
        self.div_me_when_g_too_small = float(div_me_when_g_too_small)

    def set_scaling_ratio(self, scaling_ratio: float) -> None:
        self.scaling_ratio = float(scaling_ratio)

    def __call__(self, x: jax.Array) -> jax.Array:
        if x.ndim != 2:
            raise Exception(
                "GradientModification only accept rank-2 tensor. "
                "The shape should be [batch, something]"
            )
        return _gradient_modification(
            x, self.scaling_ratio, self.epi, self.div_me_when_g_too_small
        )


# ----------------------------- reference (test) -----------------------------
def _reference_backward(g, scaling_ratio, epi, div_me_when_g_too_small):
    """Plain-JAX transcription of the PyTorch backward."""
    g = g.astype(jnp.float32)
    length = jnp.sqrt(jnp.sum(g * g, axis=1, keepdims=True))
    too_small = (length <= epi).astype(jnp.float32)
    div_me = length * (1.0 - too_small) + div_me_when_g_too_small * too_small
    return g / div_me * scaling_ratio


if __name__ == "__main__":
    key = jax.random.PRNGKey(0)
    batch, hidden = 8, 32
    x = jax.random.normal(key, (batch, hidden), dtype=jnp.float32)

    mod = GradientModification(scaling_ratio=1.0, epi=1e-05,
                               div_me_when_g_too_small=0.001)

    # Forward: identity semantics.
    y = mod(x)
    jax.block_until_ready(y)
    assert y.shape == x.shape
    assert bool(jnp.allclose(y, x))

    # Backward through jax.grad exercises the Pallas kernel (F=32 -> padded to 128).
    loss_fn = lambda inp: jnp.sum(mod(inp) ** 2)
    grad = jax.grad(loss_fn)(x)
    jax.block_until_ready(grad)
    g_in = 2.0 * x  # upstream grad of sum(y**2)
    g_expect = _reference_backward(g_in, mod.scaling_ratio, mod.epi,
                                   mod.div_me_when_g_too_small)
    assert bool(jnp.allclose(grad, g_expect, rtol=1e-5, atol=1e-6))

    # Multi-block tiled path: partial edge block (80 rows, tile 32), a zero row
    # and a near-zero row (too_small branch), and a non-unit scaling ratio.
    g_big = jax.random.normal(jax.random.PRNGKey(1), (80, 128), dtype=jnp.float32)
    g_big = g_big.at[3].set(0.0)
    g_big = g_big.at[17].set(1e-7)
    ref_big = _reference_backward(g_big, 2.0, 1e-05, 0.001)  # before the aliased call
    out_big = _backward_pallas(g_big, 2.0, 1e-05, 0.001, row_tile=32)
    jax.block_until_ready(out_big)
    assert out_big.shape == g_big.shape
    assert bool(jnp.allclose(out_big, ref_big, rtol=1e-5, atol=1e-6))

    # bf16 gradient with a non-128-multiple feature dim: exercises the padding
    # path, the bf16 sublane rounding, and the f32-upcast VMEM accounting.
    g_bf = jax.random.normal(jax.random.PRNGKey(2), (48, 96),
                             dtype=jnp.float32).astype(jnp.bfloat16)
    ref_bf = _reference_backward(g_bf, 1.5, 1e-05, 0.001)    # before the aliased call
    out_bf = _backward_pallas(g_bf, 1.5, 1e-05, 0.001)
    jax.block_until_ready(out_bf)
    assert out_bf.shape == g_bf.shape and out_bf.dtype == jnp.bfloat16
    assert bool(jnp.allclose(out_bf.astype(jnp.float32), ref_bf,
                             rtol=2e-2, atol=2e-3))

    print("KERNEL_OK")
</pallas_src>

<mosaic_0001>
module attributes {stable_mosaic.version = 11 : i64} {
  func.func @_grad_mod_bwd_kernel(%arg0: i32, %arg1: memref<8x128xf32, #tpu.memory_space<vmem>>, %arg2: memref<8x128xf32, #tpu.memory_space<vmem>>) attributes {dimension_semantics = [#tpu.dimension_semantics<parallel>], iteration_bounds = array<i64: 1>, scalar_prefetch = 0 : i64, scratch_operands = 0 : i64, tpu.core_type = #tpu.core_type<tc>, window_params = [{transform_indices = @transform_0, window_bounds = array<i64: 8, 128>}, {transform_indices = @transform_1, window_bounds = array<i64: 8, 128>}]} {
    %c0 = arith.constant 0 : index
    %c0_0 = arith.constant 0 : index
    %0 = vector.load %arg1[%c0, %c0_0] : memref<8x128xf32, #tpu.memory_space<vmem>>, vector<8x128xf32>
    %1 = arith.mulf %0, %0 : vector<8x128xf32>
    %cst = arith.constant dense<0.000000e+00> : vector<8xf32>
    %2 = vector.multi_reduction <add>, %1, %cst [1] : vector<8x128xf32> to vector<8xf32>
    %3 = vector.shape_cast %2 : vector<8xf32> to vector<8x1xf32>
    %cst_1 = arith.constant 1.000000e-10 : f32
    %4 = vector.broadcast %cst_1 : f32 to vector<8x1xf32>
    %5 = arith.cmpf ole, %3, %4 : vector<8x1xf32>
    %6 = math.rsqrt %3 : vector<8x1xf32>
    %cst_2 = arith.constant 1.000000e+03 : f32
    %7 = vector.broadcast %cst_2 : f32 to vector<8x1xf32>
    %8 = arith.select %5, %7, %6 : vector<8x1xi1>, vector<8x1xf32>
    %9 = vector.broadcast %8 : vector<8x1xf32> to vector<8x128xf32>
    %10 = arith.mulf %0, %9 : vector<8x128xf32>
    %c0_3 = arith.constant 0 : index
    %c0_4 = arith.constant 0 : index
    %11 = vector.load %arg2[%c0_3, %c0_4] : memref<8x128xf32, #tpu.memory_space<vmem>>, vector<8x128xf32>
    tpu.vector_store %arg2[%c0_3, %c0_4], %10 {strides = array<i32>} : memref<8x128xf32, #tpu.memory_space<vmem>>, vector<8x128xf32>,
    return
  }
  func.func @transform_0(%arg0: i32) -> (i32, i32) {
    %c0_i32 = arith.constant 0 : i32
    %c0_i32_0 = arith.constant 0 : i32
    return %arg0, %c0_i32 : i32, i32
  }
  func.func @transform_1(%arg0: i32) -> (i32, i32) {
    %c0_i32 = arith.constant 0 : i32
    %c0_i32_0 = arith.constant 0 : i32
    return %arg0, %c0_i32 : i32, i32
  }
}

</mosaic_0001>

<llo_original>
// kernel: tpu_custom_call.1
$region0: #{tpu_custom_call.1}
  #allocation0 [shape = 'u32[]', space=smem, size = 0x4, offset = 0x4, fixed_abs, tag = 'smem constant byte address 0x4 - core index']
  #allocation1 [shape = 'u32[144,128]{1,0:T(1,128)}', space=vmem, size = 0x12000, scoped, tag = 'internal scratch']
  %s0 = inlined_call_operand.hbm [shape: f32[8,128], index: 0, kind: input, shape index: {}, may-alias: {0,1}]
  %s1 = inlined_call_operand.hbm [shape: f32[8,128], index: 1, kind: output, shape index: {}, may-alias: {0,1}]
  %s2 = sld [smem:[#allocation0]]
  $region18: #{tpu_custom_call.1} parent=0
    _
  %s4 = ssub.s32 1, %s2
  %s5 = scalar_select 0, %s4, %s2
  $region1: #{tpu_custom_call.1} parent=0
    #allocation2 [shape = 'u8[4096]{0}', space=vmem, size = 0x1000, scoped, tag = 'input window, operand 0, single buffered']
    #allocation3 [shape = 's32[1]{0}', space=sflag, size = 0x4, scoped, tag = 'scoped memory for tpu_custom_call.1']
    #allocation4 [shape = 's32[1]{0}', space=sflag, size = 0x4, scoped, tag = 'scoped memory for tpu_custom_call.1']
    #allocation5 [shape = 'u8[4096]{0}', space=vmem, size = 0x1000, scoped, tag = 'output window, operand 0, single buffered']
    %6 = vsyncpa [#allocation3], 0
    %7 = vsyncpa [#allocation4], 0
    // Predicated region
    $region2: #{tpu_custom_call.1} parent=1 // pred_check
      _
    $region3: #{tpu_custom_call.1} parent=1 // pred_check_branch
      %9 = sbr.rel (0) target = $region5
    $region4: #{tpu_custom_call.1} parent=1 // pred_region
      %s11 = ssub.s32 128, 128
      %12 = vsyncadd [#allocation3], %s11
      %s14 = sshll.u32 [#allocation2], 4
      %s15 = int_to_ptr.vmem [resolvable:$true] %s14
      %17 = dma.hbm_to_vmem [thread:$0]  %s0, 128, %s15, [#allocation3]
    $region5: #{tpu_custom_call.1} parent=1 // pred_fallthru
      _
    // Predicated region
    $region6: #{tpu_custom_call.1} parent=1 // pred_check
      _
    $region7: #{tpu_custom_call.1} parent=1 // pred_check_branch
      %19 = sbr.rel (0) target = $region9
    $region8: #{tpu_custom_call.1} parent=1 // pred_region
      %20 = dma.done [#allocation3], 128
    $region9: #{tpu_custom_call.1} parent=1 // pred_fallthru
      _
    %v21 = vld [vmem:[#allocation2] sm:$0xff]
    %v22 = vmul.f32 %v21, %v21
    %23 = vadd.xlane.f32.xlu0 %v22
    %v24 = vpop.xlane.xlu0 %23
    %vm25 = vcmp.le.f32.partialorder %v24, 1e-10
    %v26 = vrsqrt.pop %v24
    %v27 = vsel %vm25, 1000.0, %v26
    %v28 = vmul.f32 %v21, %v27
    %29 = vst [vmem:[#allocation5] sm:$0xff] %v28
    // Predicated region
    $region10: #{tpu_custom_call.1} parent=1 // pred_check
      _
    $region11: #{tpu_custom_call.1} parent=1 // pred_check_branch
      %31 = sbr.rel (0) target = $region13
    $region12: #{tpu_custom_call.1} parent=1 // pred_region
      %s33 = ssub.s32 128, 128
      %34 = vsyncadd [#allocation4], %s33
      %s36 = sshll.u32 [#allocation5], 4
      %s37 = int_to_ptr.vmem [resolvable:$true] %s36
      %39 = dma.vmem_to_hbm [thread:$0]  %s37, 128, %s1, [#allocation4]
    $region13: #{tpu_custom_call.1} parent=1 // pred_fallthru
      _
    // Predicated region
    $region14: #{tpu_custom_call.1} parent=1 // pred_check
      _
    $region15: #{tpu_custom_call.1} parent=1 // pred_check_branch
      %41 = sbr.rel (0) target = $region17
    $region16: #{tpu_custom_call.1} parent=1 // pred_region
      %42 = dma.done [#allocation4], 128
    $region17: #{tpu_custom_call.1} parent=1 // pred_fallthru
      _
    %43 = vsyncpa [#allocation3], 1
    %44 = vsyncpa [#allocation4], 1

</llo_original>
